<compile_context>
chip_gen: v7x
topology: tpu7x:2x2x1
jax: 0.10.0
libtpu: 0.0.40
codegen_flags: <defaults>
</compile_context>

<pallas_src>
import jax
import jax.numpy as jnp
from jax import lax
from jax.experimental import pallas as pl
from jax.experimental.pallas import tpu as pltpu

BN_EPS = 1e-5  # PyTorch BatchNorm1d default eps


def encoder_head_kernel(feat_ref, w_ref, b_ref, gamma_ref, beta_ref, out_ref, acc_ref):
    # feat_ref:      [B, HW, Ct] bf16  (channel tile on lanes, spatial on sublanes)
    # w_ref:         [Ct, Ep]    f32
    # b/gamma/beta:  [1, Ep]     f32
    # out_ref:       [B, Ep]     f32   (resident across the C-tile grid)
    # acc_ref:       [B, Ep]     f32   VMEM scratch accumulator
    k = pl.program_id(0)

    @pl.when(k == 0)
    def _init():
        acc_ref[...] = jnp.zeros_like(acc_ref)

    # AdaptiveAvgPool2d((1,1)) + view(B,-1), restricted to this channel tile:
    # sublane-axis mean over HW, bf16 upcast to f32 in-register.
    pooled = jnp.mean(feat_ref[...].astype(jnp.float32), axis=1)          # [B, Ct]

    # Partial Linear: accumulate this channel tile's contribution (MXU, f32 accumulate).
    acc_ref[...] += jnp.dot(pooled, w_ref[...], preferred_element_type=jnp.float32)

    @pl.when(k == pl.num_programs(0) - 1)
    def _finalize():
        emb = acc_ref[...] + b_ref[...]                                   # Linear bias
        # BatchNorm1d training-mode forward: batch mean + biased variance over axis 0.
        mu = jnp.mean(emb, axis=0, keepdims=True)
        var = jnp.mean((emb - mu) ** 2, axis=0, keepdims=True)
        xhat = (emb - mu) * lax.rsqrt(var + BN_EPS)
        out_ref[...] = xhat * gamma_ref[...] + beta_ref[...]


def _pick_c_tile(C):
    for ct in (512, 256, 128):
        if C % ct == 0:
            return ct
    return C  # fallback: single full-C block


def encoder_cnn_head(features_nchw, w, b, gamma, beta, *, c_tile=None):
    """features_nchw: [B, C, H, W] frozen-trunk output; w: [C, E]; b/gamma/beta: [E]."""
    B, C, H, W = features_nchw.shape
    HW = H * W
    E = w.shape[1]
    assert B > 1, "BatchNorm1d training-mode statistics require batch size > 1"

    if c_tile is None:
        c_tile = _pick_c_tile(C)
    assert C % c_tile == 0
    num_c_tiles = C // c_tile

    # NHWC-style layout (channels on lanes) + bf16 feature DMA.  A real pipeline would
    # emit the trunk features already in this layout; here it's wrapper-side plumbing.
    feat = jnp.transpose(features_nchw.reshape(B, C, HW), (0, 2, 1))      # [B, HW, C]
    feat = feat.astype(jnp.bfloat16)

    # Pad embed dim to a lane-dense multiple of 128 (padded columns stay exactly 0).
    Ep = ((E + 127) // 128) * 128
    pad_e = Ep - E
    w_p = jnp.pad(w.astype(jnp.float32), ((0, 0), (0, pad_e)))
    b_p = jnp.pad(b.astype(jnp.float32).reshape(1, E), ((0, 0), (0, pad_e)))
    g_p = jnp.pad(gamma.astype(jnp.float32).reshape(1, E), ((0, 0), (0, pad_e)))
    be_p = jnp.pad(beta.astype(jnp.float32).reshape(1, E), ((0, 0), (0, pad_e)))

    # VMEM budget: double-buffered feature + weight tiles plus resident small arrays,
    # clamped to stay safe on v5e (16 MiB scoped default) and v7x (64 MiB physical).
    feat_tile_bytes = B * HW * c_tile * feat.dtype.itemsize
    w_tile_bytes = c_tile * Ep * 4
    resident_bytes = (3 * Ep + 2 * B * Ep) * 4
    vmem_limit = int(min(max(2 * (feat_tile_bytes + w_tile_bytes) + resident_bytes + (4 << 20),
                             16 << 20), 48 << 20))

    cost = pl.CostEstimate(
        flops=2 * B * C * Ep + B * C * HW,
        transcendentals=Ep,
        bytes_accessed=feat.size * feat.dtype.itemsize + w_p.size * 4 + B * Ep * 4,
    )

    grid_spec = pltpu.PrefetchScalarGridSpec(
        num_scalar_prefetch=0,
        grid=(num_c_tiles,),
        in_specs=[
            pl.BlockSpec((B, HW, c_tile), lambda k: (0, 0, k)),   # feature C-tile
            pl.BlockSpec((c_tile, Ep), lambda k: (k, 0)),         # weight  C-tile
            pl.BlockSpec((1, Ep), lambda k: (0, 0)),              # bias
            pl.BlockSpec((1, Ep), lambda k: (0, 0)),              # gamma
            pl.BlockSpec((1, Ep), lambda k: (0, 0)),              # beta
        ],
        out_specs=pl.BlockSpec((B, Ep), lambda k: (0, 0)),
        scratch_shapes=[pltpu.VMEM((B, Ep), jnp.float32)],
    )

    out_padded = pl.pallas_call(
        encoder_head_kernel,
        out_shape=jax.ShapeDtypeStruct((B, Ep), jnp.float32),
        grid_spec=grid_spec,
        compiler_params=pltpu.CompilerParams(
            dimension_semantics=("arbitrary",),   # C axis is a reduction
            vmem_limit_bytes=vmem_limit,
        ),
        cost_estimate=cost,
    )(feat, w_p, b_p, g_p, be_p)

    return out_padded[:, :E]


if __name__ == "__main__":
    key = jax.random.PRNGKey(0)
    # Small stand-ins: B=2 images; C=256 stands in for ResNet50's 2048 pooled features
    # (resnet.fc.in_features); 4x4 trunk spatial grid; embed_size=32.
    B, C, H, W = 2, 256, 4, 4
    E = 32

    k_feat, k_w, k_b = jax.random.split(key, 3)
    features = jax.random.normal(k_feat, (B, C, H, W), dtype=jnp.float32)
    # embed weight already stored transposed to [in_features, embed_size]
    w = jax.random.normal(k_w, (C, E), dtype=jnp.float32) * 0.02
    b = jax.random.normal(k_b, (E,), dtype=jnp.float32) * 0.01
    gamma = jnp.ones((E,), dtype=jnp.float32)    # BatchNorm1d default weight
    beta = jnp.zeros((E,), dtype=jnp.float32)    # BatchNorm1d default bias

    # c_tile=128 -> 2-step reduction grid, exercising the pipelined accumulator path.
    out = jax.block_until_ready(encoder_cnn_head(features, w, b, gamma, beta, c_tile=128))

    # Pure-JAX reference of the same forward semantics (with the same bf16 feature
    # quantization the kernel DMAs).
    feat_q = features.astype(jnp.bfloat16).astype(jnp.float32)
    pooled = feat_q.reshape(B, C, H * W).mean(axis=-1)
    emb = pooled @ w + b
    mu = emb.mean(axis=0, keepdims=True)
    var = ((emb - mu) ** 2).mean(axis=0, keepdims=True)
    ref = (emb - mu) / jnp.sqrt(var + BN_EPS) * gamma + beta

    assert out.shape == (B, E) and out.dtype == jnp.float32
    assert jnp.allclose(out, ref, atol=2e-3, rtol=2e-3), "mismatch vs reference"
    print("KERNEL_OK")
</pallas_src>

<mosaic_0001>
module attributes {stable_mosaic.version = 11 : i64} {
  func.func @encoder_head_kernel(%arg0: i32, %arg1: memref<2x16x128xbf16, #tpu.memory_space<vmem>>, %arg2: memref<128x128xf32, #tpu.memory_space<vmem>>, %arg3: memref<1x128xf32, #tpu.memory_space<vmem>>, %arg4: memref<1x128xf32, #tpu.memory_space<vmem>>, %arg5: memref<1x128xf32, #tpu.memory_space<vmem>>, %arg6: memref<2x128xf32, #tpu.memory_space<vmem>>, %arg7: memref<2x128xf32, #tpu.memory_space<vmem>>) attributes {dimension_semantics = [#tpu.dimension_semantics<arbitrary>], iteration_bounds = array<i64: 2>, scalar_prefetch = 0 : i64, scratch_operands = 1 : i64, tpu.core_type = #tpu.core_type<tc>, window_params = [{transform_indices = @transform_0, window_bounds = array<i64: 2, 16, 128>}, {transform_indices = @transform_1, window_bounds = array<i64: 128, 128>}, {pipeline_mode = #tpu.pipeline_mode<synchronous>, transform_indices = @transform_2, window_bounds = array<i64: 1, 128>}, {pipeline_mode = #tpu.pipeline_mode<synchronous>, transform_indices = @transform_3, window_bounds = array<i64: 1, 128>}, {pipeline_mode = #tpu.pipeline_mode<synchronous>, transform_indices = @transform_4, window_bounds = array<i64: 1, 128>}, {pipeline_mode = #tpu.pipeline_mode<synchronous>, transform_indices = @transform_5, window_bounds = array<i64: 2, 128>}]} {
    %c0_i32 = arith.constant 0 : i32
    %0 = arith.cmpi eq, %arg0, %c0_i32 : i32
    %1 = arith.extui %0 : i1 to i32
    %c0_i32_0 = arith.constant 0 : i32
    %2 = arith.cmpi ne, %1, %c0_i32_0 : i32
    scf.if %2 {
      %cst_12 = arith.constant 0.000000e+00 : f32
      %16 = vector.broadcast %cst_12 : f32 to vector<2x128xf32>
      %c0_13 = arith.constant 0 : index
      %c0_14 = arith.constant 0 : index
      %17 = vector.load %arg7[%c0_13, %c0_14] : memref<2x128xf32, #tpu.memory_space<vmem>>, vector<2x128xf32>
      tpu.vector_store %arg7[%c0_13, %c0_14], %16 {strides = array<i32>} : memref<2x128xf32, #tpu.memory_space<vmem>>, vector<2x128xf32>,
    } else {
    }
    %c0 = arith.constant 0 : index
    %c0_1 = arith.constant 0 : index
    %c0_2 = arith.constant 0 : index
    %3 = vector.load %arg1[%c0, %c0_1, %c0_2] : memref<2x16x128xbf16, #tpu.memory_space<vmem>>, vector<2x16x128xbf16>
    %4 = arith.extf %3 : vector<2x16x128xbf16> to vector<2x16x128xf32>
    %cst = arith.constant dense<0.000000e+00> : vector<2x128xf32>
    %5 = vector.multi_reduction <add>, %4, %cst [1] : vector<2x16x128xf32> to vector<2x128xf32>
    %cst_3 = arith.constant 1.600000e+01 : f32
    %6 = vector.broadcast %cst_3 : f32 to vector<2x128xf32>
    %7 = arith.divf %5, %6 : vector<2x128xf32>
    %c0_4 = arith.constant 0 : index
    %c0_5 = arith.constant 0 : index
    %8 = vector.load %arg7[%c0_4, %c0_5] : memref<2x128xf32, #tpu.memory_space<vmem>>, vector<2x128xf32>
    %c0_6 = arith.constant 0 : index
    %c0_7 = arith.constant 0 : index
    %9 = vector.load %arg2[%c0_6, %c0_7] : memref<128x128xf32, #tpu.memory_space<vmem>>, vector<128x128xf32>
    %cst_8 = arith.constant dense<0.000000e+00> : vector<2x128xf32>
    %10 = tpu.matmul %7, %9, %cst_8 {dimension_numbers = #tpu.dot_dimension_numbers<[1], [0], [0], [1], [0, 0, 1, 1], [], []>} : vector<2x128xf32>, vector<128x128xf32>, vector<2x128xf32> -> vector<2x128xf32>
    %11 = arith.addf %8, %10 : vector<2x128xf32>
    %c0_9 = arith.constant 0 : index
    %c0_10 = arith.constant 0 : index
    %12 = vector.load %arg7[%c0_9, %c0_10] : memref<2x128xf32, #tpu.memory_space<vmem>>, vector<2x128xf32>
    tpu.vector_store %arg7[%c0_9, %c0_10], %11 {strides = array<i32>} : memref<2x128xf32, #tpu.memory_space<vmem>>, vector<2x128xf32>,
    %c1_i32 = arith.constant 1 : i32
    %13 = arith.cmpi eq, %arg0, %c1_i32 : i32
    %14 = arith.extui %13 : i1 to i32
    %c0_i32_11 = arith.constant 0 : i32
    %15 = arith.cmpi ne, %14, %c0_i32_11 : i32
    scf.if %15 {
      %c0_12 = arith.constant 0 : index
      %c0_13 = arith.constant 0 : index
      %16 = vector.load %arg7[%c0_12, %c0_13] : memref<2x128xf32, #tpu.memory_space<vmem>>, vector<2x128xf32>
      %c0_14 = arith.constant 0 : index
      %c0_15 = arith.constant 0 : index
      %17 = vector.load %arg3[%c0_14, %c0_15] : memref<1x128xf32, #tpu.memory_space<vmem>>, vector<1x128xf32>
      %18 = vector.broadcast %17 : vector<1x128xf32> to vector<2x128xf32>
      %19 = arith.addf %16, %18 : vector<2x128xf32>
      %cst_16 = arith.constant dense<0.000000e+00> : vector<128xf32>
      %20 = vector.multi_reduction <add>, %19, %cst_16 [0] : vector<2x128xf32> to vector<128xf32>
      %21 = vector.shape_cast %20 : vector<128xf32> to vector<1x128xf32>
      %cst_17 = arith.constant 2.000000e+00 : f32
      %22 = vector.broadcast %cst_17 : f32 to vector<1x128xf32>
      %23 = arith.divf %21, %22 : vector<1x128xf32>
      %24 = vector.broadcast %23 : vector<1x128xf32> to vector<2x128xf32>
      %25 = arith.subf %19, %24 : vector<2x128xf32>
      %26 = arith.mulf %25, %25 : vector<2x128xf32>
      %cst_18 = arith.constant dense<0.000000e+00> : vector<128xf32>
      %27 = vector.multi_reduction <add>, %26, %cst_18 [0] : vector<2x128xf32> to vector<128xf32>
      %28 = vector.shape_cast %27 : vector<128xf32> to vector<1x128xf32>
      %cst_19 = arith.constant 2.000000e+00 : f32
      %29 = vector.broadcast %cst_19 : f32 to vector<1x128xf32>
      %30 = arith.divf %28, %29 : vector<1x128xf32>
      %31 = vector.broadcast %23 : vector<1x128xf32> to vector<2x128xf32>
      %32 = arith.subf %19, %31 : vector<2x128xf32>
      %cst_20 = arith.constant 9.99999974E-6 : f32
      %33 = vector.broadcast %cst_20 : f32 to vector<1x128xf32>
      %34 = arith.addf %30, %33 : vector<1x128xf32>
      %35 = math.rsqrt %34 : vector<1x128xf32>
      %36 = vector.broadcast %35 : vector<1x128xf32> to vector<2x128xf32>
      %37 = arith.mulf %32, %36 : vector<2x128xf32>
      %c0_21 = arith.constant 0 : index
      %c0_22 = arith.constant 0 : index
      %38 = vector.load %arg4[%c0_21, %c0_22] : memref<1x128xf32, #tpu.memory_space<vmem>>, vector<1x128xf32>
      %39 = vector.broadcast %38 : vector<1x128xf32> to vector<2x128xf32>
      %40 = arith.mulf %37, %39 : vector<2x128xf32>
      %c0_23 = arith.constant 0 : index
      %c0_24 = arith.constant 0 : index
      %41 = vector.load %arg5[%c0_23, %c0_24] : memref<1x128xf32, #tpu.memory_space<vmem>>, vector<1x128xf32>
      %42 = vector.broadcast %41 : vector<1x128xf32> to vector<2x128xf32>
      %43 = arith.addf %40, %42 : vector<2x128xf32>
      %c0_25 = arith.constant 0 : index
      %c0_26 = arith.constant 0 : index
      %44 = vector.load %arg6[%c0_25, %c0_26] : memref<2x128xf32, #tpu.memory_space<vmem>>, vector<2x128xf32>
      tpu.vector_store %arg6[%c0_25, %c0_26], %43 {strides = array<i32>} : memref<2x128xf32, #tpu.memory_space<vmem>>, vector<2x128xf32>,
    } else {
    }
    return
  }
  func.func @transform_0(%arg0: i32) -> (i32, i32, i32) {
    %c0_i32 = arith.constant 0 : i32
    %c0_i32_0 = arith.constant 0 : i32
    %c0_i32_1 = arith.constant 0 : i32
    return %c0_i32, %c0_i32_0, %arg0 : i32, i32, i32
  }
  func.func @transform_1(%arg0: i32) -> (i32, i32) {
    %c0_i32 = arith.constant 0 : i32
    %c0_i32_0 = arith.constant 0 : i32
    return %arg0, %c0_i32 : i32, i32
  }
  func.func @transform_2(%arg0: i32) -> (i32, i32) {
    %c0_i32 = arith.constant 0 : i32
    %c0_i32_0 = arith.constant 0 : i32
    %c0_i32_1 = arith.constant 0 : i32
    return %c0_i32, %c0_i32_0 : i32, i32
  }
  func.func @transform_3(%arg0: i32) -> (i32, i32) {
    %c0_i32 = arith.constant 0 : i32
    %c0_i32_0 = arith.constant 0 : i32
    %c0_i32_1 = arith.constant 0 : i32
    return %c0_i32, %c0_i32_0 : i32, i32
  }
  func.func @transform_4(%arg0: i32) -> (i32, i32) {
    %c0_i32 = arith.constant 0 : i32
    %c0_i32_0 = arith.constant 0 : i32
    %c0_i32_1 = arith.constant 0 : i32
    return %c0_i32, %c0_i32_0 : i32, i32
  }
  func.func @transform_5(%arg0: i32) -> (i32, i32) {
    %c0_i32 = arith.constant 0 : i32
    %c0_i32_0 = arith.constant 0 : i32
    %c0_i32_1 = arith.constant 0 : i32
    return %c0_i32, %c0_i32_0 : i32, i32
  }
}

</mosaic_0001>

<llo_original>
// kernel: tpu_custom_call.1
$region0: #{tpu_custom_call.1}
  #allocation0 [shape = 'u32[]', space=smem, size = 0x4, offset = 0x4, fixed_abs, tag = 'smem constant byte address 0x4 - core index']
  #allocation1 [shape = 'u32[144,128]{1,0:T(1,128)}', space=vmem, size = 0x12000, scoped, tag = 'internal scratch']
  #allocation2 [shape = 'f32[2,128]{1,0:T(2,128)}', space=vmem, size = 0x400, scoped, tag = 'scratch operand']
  %s0 = inlined_call_operand.hbm [shape: bf16[2,16,256], index: 0, kind: input, shape index: {}]
  %s1 = inlined_call_operand.hbm [shape: f32[256,128], index: 1, kind: input, shape index: {}]
  %s2 = inlined_call_operand.vmem [shape: f32[1,128], index: 2, kind: input, shape index: {}]
  %s3 = inlined_call_operand.vmem [shape: f32[1,128], index: 3, kind: input, shape index: {}]
  %s4 = inlined_call_operand.vmem [shape: f32[1,128], index: 4, kind: input, shape index: {}]
  %s5 = inlined_call_operand.hbm [shape: f32[2,128], index: 5, kind: output, shape index: {}]
  %s6 = sld [smem:[#allocation0]]
  $region69: #{tpu_custom_call.1} parent=0
    _
  %s8 = ssub.s32 1, %s6
  %s9 = scalar_select 0, %s8, %s6
  $region1: #{tpu_custom_call.1} parent=0
    #allocation3 [shape = 'u8[16384]{0}', space=vmem, size = 0x4000, scoped, tag = 'input window, operand 0']
    #allocation4 [shape = 's32[2]{0}', space=sflag, size = 0x8, scoped, tag = 'scoped memory for tpu_custom_call.1']
    #allocation5 [shape = 's32[2]{0}', space=sflag, size = 0x8, scoped, tag = 'scoped memory for tpu_custom_call.1']
    #allocation6 [shape = 'u8[131072]{0}', space=vmem, size = 0x20000, scoped, tag = 'input window, operand 1']
    #allocation7 [shape = 's32[2]{0}', space=sflag, size = 0x8, scoped, tag = 'scoped memory for tpu_custom_call.1']
    #allocation8 [shape = 'u8[1024]{0}', space=vmem, size = 0x400, scoped, tag = 'output window, operand 0, single buffered']
    %10 = vsyncpa [#allocation4], 0
    %s11 = scalar_lea.sflag [#allocation4], 1
    %12 = vsyncpa %s11, 0
    %13 = vsyncpa [#allocation7], 0
    %s14 = scalar_lea.sflag [#allocation7], 1
    %15 = vsyncpa %s14, 0
    %16 = vsyncpa [#allocation5], 0
    loop: start=0, step=1, limit=4
    $region2: #{tpu_custom_call.1} parent=1 // loop_pre_header
      _
    $region3: #{tpu_custom_call.1} parent=1 // loop_header
      %s18 = sphi 0, %s22
      %p19 = scmp.ge.s32.totalorder %s18, 4
      %s28 = sphi 0, %s30
      %s31 = sphi 0, %s28
      %s32 = sphi 0, %s31
      %s48 = sphi 0, %s32
      %s54 = sphi 0, %s56
      %s57 = sphi 0, %s54
      %s58 = sphi 0, %s57
      %s74 = sphi 0, %s58
      %s78 = sphi 0, %s78
      %s80 = sphi 0, %s78
      %s81 = sphi 0, %s80
      %s95 = sphi 0, %s81
      %s99 = sphi 0, %s99
      %s101 = sphi 0, %s99
      %s102 = sphi 0, %s101
      %s116 = sphi 0, %s102
      %s120 = sphi 0, %s120
      %s122 = sphi 0, %s120
      %s123 = sphi 0, %s122
      %s137 = sphi 0, %s123
      %s141 = sphi 0, %s141
      %s143 = sphi 0, %s141
      %s144 = sphi 0, %s143
      %s158 = sphi 0, %s144
    $region4: #{tpu_custom_call.1} parent=1 // loop_header_branch
      %21 = sbr.rel (%p19) target = $region8
    $region5: #{tpu_custom_call.1} parent=1 // loop_body
      %s23 = ssub.s32 %s18, 1
      %s24 = ssub.s32 %s18, 2
      %s25 = sadd.s32 %s18, 1
      %s26 = ssub.s32 %s18, %s25
      %p27 = scmp.eq.s32.totalorder %s26, 0
      %s29 = sadd.s32 %s28, 1
      %s30 = scalar_select %p27, %s28, %s29
      %p33 = pneg %p27
      %p34 = scmp.eq.s32.totalorder %s18, 1
      %p35 = por %p33, %p34
      %p36 = scmp.ne.s32.totalorder %s28, %s31
      %p37 = scmp.eq.s32.totalorder %s18, 0
      %p38 = por %p36, %p37
      %p39 = scmp.ne.s32.totalorder %s28, %s31
      %p40 = scmp.eq.s32.totalorder %s23, 1
      %p41 = por %p39, %p40
      %p42 = scmp.ne.s32.totalorder %s31, %s32
      %p43 = scmp.eq.s32.totalorder %s23, 0
      %p44 = por %p42, %p43
      %p45 = scmp.ne.s32.totalorder %s31, %s32
      %p46 = scmp.eq.s32.totalorder %s24, 1
      %p47 = por %p45, %p46
      %p49 = scmp.ne.s32.totalorder %s32, %s48
      %p50 = scmp.eq.s32.totalorder %s24, 0
      %p51 = por %p49, %p50
      %s52 = ssub.s32 %s18, %s25
      %p53 = scmp.eq.s32.totalorder %s52, 0
      %s55 = sadd.s32 %s54, 1
      %s56 = scalar_select %p53, %s54, %s55
      %p59 = pneg %p53
      %p60 = scmp.eq.s32.totalorder %s18, 1
      %p61 = por %p59, %p60
      %p62 = scmp.ne.s32.totalorder %s54, %s57
      %p63 = scmp.eq.s32.totalorder %s18, 0
      %p64 = por %p62, %p63
      %p65 = scmp.ne.s32.totalorder %s54, %s57
      %p66 = scmp.eq.s32.totalorder %s23, 1
      %p67 = por %p65, %p66
      %p68 = scmp.ne.s32.totalorder %s57, %s58
      %p69 = scmp.eq.s32.totalorder %s23, 0
      %p70 = por %p68, %p69
      %p71 = scmp.ne.s32.totalorder %s57, %s58
      %p72 = scmp.eq.s32.totalorder %s24, 1
      %p73 = por %p71, %p72
      %p75 = scmp.ne.s32.totalorder %s58, %s74
      %p76 = scmp.eq.s32.totalorder %s24, 0
      %p77 = por %p75, %p76
      %s79 = sadd.s32 %s78, 1
      %p82 = scmp.eq.s32.totalorder %s18, 1
      %p83 = scmp.ne.s32.totalorder %s78, %s80
      %p84 = scmp.eq.s32.totalorder %s18, 0
      %p85 = por %p83, %p84
      %p86 = scmp.ne.s32.totalorder %s78, %s80
      %p87 = scmp.eq.s32.totalorder %s23, 1
      %p88 = por %p86, %p87
      %p89 = scmp.ne.s32.totalorder %s80, %s81
      %p90 = scmp.eq.s32.totalorder %s23, 0
      %p91 = por %p89, %p90
      %p92 = scmp.ne.s32.totalorder %s80, %s81
      %p93 = scmp.eq.s32.totalorder %s24, 1
      %p94 = por %p92, %p93
      %p96 = scmp.ne.s32.totalorder %s81, %s95
      %p97 = scmp.eq.s32.totalorder %s24, 0
      %p98 = por %p96, %p97
      %s100 = sadd.s32 %s99, 1
      %p103 = scmp.eq.s32.totalorder %s18, 1
      %p104 = scmp.ne.s32.totalorder %s99, %s101
      %p105 = scmp.eq.s32.totalorder %s18, 0
      %p106 = por %p104, %p105
      %p107 = scmp.ne.s32.totalorder %s99, %s101
      %p108 = scmp.eq.s32.totalorder %s23, 1
      %p109 = por %p107, %p108
      %p110 = scmp.ne.s32.totalorder %s101, %s102
      %p111 = scmp.eq.s32.totalorder %s23, 0
      %p112 = por %p110, %p111
      %p113 = scmp.ne.s32.totalorder %s101, %s102
      %p114 = scmp.eq.s32.totalorder %s24, 1
      %p115 = por %p113, %p114
      %p117 = scmp.ne.s32.totalorder %s102, %s116
      %p118 = scmp.eq.s32.totalorder %s24, 0
      %p119 = por %p117, %p118
      %s121 = sadd.s32 %s120, 1
      %p124 = scmp.eq.s32.totalorder %s18, 1
      %p125 = scmp.ne.s32.totalorder %s120, %s122
      %p126 = scmp.eq.s32.totalorder %s18, 0
      %p127 = por %p125, %p126
      %p128 = scmp.ne.s32.totalorder %s120, %s122
      %p129 = scmp.eq.s32.totalorder %s23, 1
      %p130 = por %p128, %p129
      %p131 = scmp.ne.s32.totalorder %s122, %s123
      %p132 = scmp.eq.s32.totalorder %s23, 0
      %p133 = por %p131, %p132
      %p134 = scmp.ne.s32.totalorder %s122, %s123
      %p135 = scmp.eq.s32.totalorder %s24, 1
      %p136 = por %p134, %p135
      %p138 = scmp.ne.s32.totalorder %s123, %s137
      %p139 = scmp.eq.s32.totalorder %s24, 0
      %p140 = por %p138, %p139
      %s142 = sadd.s32 %s141, 1
      %p145 = scmp.eq.s32.totalorder %s18, 1
      %p146 = scmp.ne.s32.totalorder %s141, %s143
      %p147 = scmp.eq.s32.totalorder %s18, 0
      %p148 = por %p146, %p147
      %p149 = scmp.ne.s32.totalorder %s141, %s143
      %p150 = scmp.eq.s32.totalorder %s23, 1
      %p151 = por %p149, %p150
      %p152 = scmp.ne.s32.totalorder %s143, %s144
      %p153 = scmp.eq.s32.totalorder %s23, 0
      %p154 = por %p152, %p153
      %p155 = scmp.ne.s32.totalorder %s143, %s144
      %p156 = scmp.eq.s32.totalorder %s24, 1
      %p157 = por %p155, %p156
      %p159 = scmp.ne.s32.totalorder %s144, %s158
      %p160 = scmp.eq.s32.totalorder %s24, 0
      %p161 = por %p159, %p160
      %p162 = scmp.le.s32.totalorder 1, %s18
      %p163 = scmp.lt.s32.totalorder %s18, 3
      %p164 = pnand %p162, %p163
      %p165 = pneg %p164
      // Predicated region
      $region9: #{tpu_custom_call.1} parent=5 // pred_check
        _
      $region10: #{tpu_custom_call.1} parent=5 // pred_check_branch
        %167 = sbr.rel (%p164) target = $region12
      $region11: #{tpu_custom_call.1} parent=5 // pred_region
        %s168 = ssub.s32 %s18, 1
        // Predicated region
        $region13: #{tpu_custom_call.1} parent=11 // pred_check
          %p169 = pneg %p91
        $region14: #{tpu_custom_call.1} parent=11 // pred_check_branch
          %171 = sbr.rel (%p169) target = $region16
        $region15: #{tpu_custom_call.1} parent=11 // pred_region
          _
        $region16: #{tpu_custom_call.1} parent=11 // pred_fallthru
          _
        // Predicated region
        $region17: #{tpu_custom_call.1} parent=11 // pred_check
          %p172 = pneg %p112
        $region18: #{tpu_custom_call.1} parent=11 // pred_check_branch
          %174 = sbr.rel (%p172) target = $region20
        $region19: #{tpu_custom_call.1} parent=11 // pred_region
          _
        $region20: #{tpu_custom_call.1} parent=11 // pred_fallthru
          _
        // Predicated region
        $region21: #{tpu_custom_call.1} parent=11 // pred_check
          %p175 = pneg %p133
        $region22: #{tpu_custom_call.1} parent=11 // pred_check_branch
          %177 = sbr.rel (%p175) target = $region24
        $region23: #{tpu_custom_call.1} parent=11 // pred_region
          _
        $region24: #{tpu_custom_call.1} parent=11 // pred_fallthru
          _
      $region12: #{tpu_custom_call.1} parent=5 // pred_fallthru
        _
      %p178 = scmp.lt.s32.totalorder %s18, 2
      // Predicated region
      $region25: #{tpu_custom_call.1} parent=5 // pred_check
        %p179 = pneg %p178
      $region26: #{tpu_custom_call.1} parent=5 // pred_check_branch
        %181 = sbr.rel (%p179) target = $region28
      $region27: #{tpu_custom_call.1} parent=5 // pred_region
        // Predicated region
        $region29: #{tpu_custom_call.1} parent=27 // pred_check
          %p182 = pneg %p38
        $region30: #{tpu_custom_call.1} parent=27 // pred_check_branch
          %184 = sbr.rel (%p182) target = $region32
        $region31: #{tpu_custom_call.1} parent=27 // pred_region
          %s185 = sand.u32 %s28, 1
          %s186 = scalar_lea.sflag [#allocation4], %s185
          %s187 = sand.u32 %s28, 1
          %s188 = smul.addr %s187, 16
          %s189 = scalar_lea.vmem [#allocation3], %s188
          %s191 = ssub.s32 256, 256
          %192 = vsyncadd %s186, %s191
          %s193 = smul.addr %s18, 64
          %s194 = scalar_lea.hbm %s0, %s193
          %s195 = sshll.u32 %s189, 4
          %s196 = int_to_ptr.vmem [resolvable:$true] %s195
          %201 = dma.hbm_to_vmem [thread:$0]  %s194, 256, %s196, %s186, 128, 64, 4
        $region32: #{tpu_custom_call.1} parent=27 // pred_fallthru
          _
        // Predicated region
        $region33: #{tpu_custom_call.1} parent=27 // pred_check
          %p202 = pneg %p64
        $region34: #{tpu_custom_call.1} parent=27 // pred_check_branch
          %204 = sbr.rel (%p202) target = $region36
        $region35: #{tpu_custom_call.1} parent=27 // pred_region
          %s205 = sand.u32 %s54, 1
          %s206 = scalar_lea.sflag [#allocation7], %s205
          %s207 = sand.u32 %s54, 1
          %s208 = smul.addr %s207, 128
          %s209 = scalar_lea.vmem [#allocation6], %s208
          %s210 = smul.u32 16, %s18
          %s212 = ssub.s32 2048, 2048
          %213 = vsyncadd %s206, %s212
          %s214 = smul.addr %s210, 128
          %s215 = scalar_lea.hbm %s1, %s214
          %s216 = sshll.u32 %s209, 4
          %s217 = int_to_ptr.vmem [resolvable:$true] %s216
          %222 = dma.hbm_to_vmem [thread:$0]  %s215, 2048, %s217, %s206, 128, 128, 8
        $region36: #{tpu_custom_call.1} parent=27 // pred_fallthru
          _
      $region28: #{tpu_custom_call.1} parent=5 // pred_fallthru
        _
      %p223 = scmp.le.s32.totalorder 1, %s18
      %p224 = scmp.lt.s32.totalorder %s18, 3
      %p225 = pnand %p223, %p224
      %p226 = pneg %p225
      // Predicated region
      $region37: #{tpu_custom_call.1} parent=5 // pred_check
        _
      $region38: #{tpu_custom_call.1} parent=5 // pred_check_branch
        %228 = sbr.rel (%p225) target = $region40
      $region39: #{tpu_custom_call.1} parent=5 // pred_region
        %s229 = ssub.s32 %s18, 1
        %s230 = sand.u32 %s31, 1
        %s231 = scalar_lea.sflag [#allocation4], %s230
        %s232 = sand.u32 %s31, 1
        %s233 = smul.addr %s232, 16
        %s234 = scalar_lea.vmem [#allocation3], %s233
        // Predicated region
        $region41: #{tpu_custom_call.1} parent=39 // pred_check
          %p235 = pneg %p44
        $region42: #{tpu_custom_call.1} parent=39 // pred_check_branch
          %237 = sbr.rel (%p235) target = $region44
        $region43: #{tpu_custom_call.1} parent=39 // pred_region
          %238 = dma.done %s231, 256
        $region44: #{tpu_custom_call.1} parent=39 // pred_fallthru
          _
        %s239 = sand.u32 %s57, 1
        %s240 = scalar_lea.sflag [#allocation7], %s239
        %s241 = sand.u32 %s57, 1
        %s242 = smul.addr %s241, 128
        %s243 = scalar_lea.vmem [#allocation6], %s242
        // Predicated region
        $region45: #{tpu_custom_call.1} parent=39 // pred_check
          %p244 = pneg %p70
        $region46: #{tpu_custom_call.1} parent=39 // pred_check_branch
          %246 = sbr.rel (%p244) target = $region48
        $region47: #{tpu_custom_call.1} parent=39 // pred_region
          %247 = dma.done %s240, 2048
        $region48: #{tpu_custom_call.1} parent=39 // pred_fallthru
          _
        %s248 = sand.u32 %s31, 1
        %s249 = scalar_lea.sflag [#allocation4], %s248
        %s250 = sand.u32 %s31, 1
        %s251 = smul.addr %s250, 16
        %s252 = scalar_lea.vmem [#allocation3], %s251
        %p253 = pneg %p44
        %p254 = pneg %p41
        %s255 = sand.u32 %s57, 1
        %s256 = scalar_lea.sflag [#allocation7], %s255
        %s257 = sand.u32 %s57, 1
        %s258 = smul.addr %s257, 128
        %s259 = scalar_lea.vmem [#allocation6], %s258
        %p260 = pneg %p70
        %p261 = pneg %p67
        %p262 = pneg %p91
        %p263 = pneg %p88
        %p264 = pneg %p112
        %p265 = pneg %p109
        %p266 = pneg %p133
        %p267 = pneg %p130
        %p268 = pneg %p154
        %p269 = pneg %p151
        %s270 = smul.u32 16, %s23
        %p271 = scmp.eq.s32.totalorder %s23, 0
        // Predicated region
        $region49: #{tpu_custom_call.1} parent=39 // pred_check
          %p272 = pneg %p271
        $region50: #{tpu_custom_call.1} parent=39 // pred_check_branch
          %274 = sbr.rel (%p272) target = $region52
        $region51: #{tpu_custom_call.1} parent=39 // pred_region
          %275 = vst [vmem:[#allocation2] sm:$0x3] 0.0
        $region52: #{tpu_custom_call.1} parent=39 // pred_fallthru
          _
        %v276 = vld [vmem:[%s234] sm:$0xf]
        %v277 = vld [vmem:[%s234 + $0x4] sm:$0xf]
        %v278 = vld [vmem:[%s234 + $0x8] sm:$0xf]
        %v279 = vld [vmem:[%s234 + $0xc] sm:$0xf]
        %v280 = vunpack.c.l.bf16 %v276
        %v281 = vunpack.c.l.bf16 %v277
        %v282 = vunpack.c.l.bf16 %v278
        %v283 = vunpack.c.l.bf16 %v279
        %v284 = vadd.f32 %v280, %v281
        %v285 = vrot.slane %v284, 4
        %v286 = vadd.f32 %v284, %v285
        %v287 = vrot.slane %v286, 2
        %v288 = vadd.f32 %v286, %v287
        %v289 = vrot.slane %v288, 1
        %v290 = vadd.f32 %v288, %v289
        %v291 = vadd.f32 %v282, %v283
        %v292 = vrot.slane %v291, 4
        %v293 = vadd.f32 %v291, %v292
        %v294 = vrot.slane %v293, 2
        %v295 = vadd.f32 %v293, %v294
        %v296 = vrot.slane %v295, 1
        %v297 = vadd.f32 %v295, %v296
        %v298 = vrcp.pop 16.0
        %v299 = vmul.f32 %v290, %v298
        %v300 = vmul.f32 %v297, %v298
        %v301 = vld [vmem:[#allocation2] sm:$0x3]
        %v302 = vld [vmem:[%s243] sm:$0xff]
        %v303 = vld [vmem:[%s243 + $0x8] sm:$0xff]
        %v304 = vld [vmem:[%s243 + $0x10] sm:$0xff]
        %v305 = vld [vmem:[%s243 + $0x18] sm:$0xff]
        %v306 = vld [vmem:[%s243 + $0x20] sm:$0xff]
        %v307 = vld [vmem:[%s243 + $0x28] sm:$0xff]
        %v308 = vld [vmem:[%s243 + $0x30] sm:$0xff]
        %v309 = vld [vmem:[%s243 + $0x38] sm:$0xff]
        %v310 = vld [vmem:[%s243 + $0x40] sm:$0xff]
        %v311 = vld [vmem:[%s243 + $0x48] sm:$0xff]
        %v312 = vld [vmem:[%s243 + $0x50] sm:$0xff]
        %v313 = vld [vmem:[%s243 + $0x58] sm:$0xff]
        %v314 = vld [vmem:[%s243 + $0x60] sm:$0xff]
        %v315 = vld [vmem:[%s243 + $0x68] sm:$0xff]
        %v316 = vld [vmem:[%s243 + $0x70] sm:$0xff]
        %v317 = vld [vmem:[%s243 + $0x78] sm:$0xff]
        %vm320 = vcmask 1041409
        %v321 = vsel %vm320, %v300, %v299
        %323 = vmatprep.subr.mxu0 0.0
        %324 = vmatpush1.msra.mxu0 %v302
        %325 = vmatprep.subr.mxu0 0.0
        %326 = vmatpush1.msra.mxu0 %v303
        %327 = vmatprep.subr.mxu0 0.0
        %328 = vmatpush1.msra.mxu0 %v304
        %329 = vmatprep.subr.mxu0 0.0
        %330 = vmatpush1.msra.mxu0 %v305
        %331 = vmatprep.subr.mxu0 0.0
        %332 = vmatpush1.msra.mxu0 %v306
        %333 = vmatprep.subr.mxu0 0.0
        %334 = vmatpush1.msra.mxu0 %v307
        %335 = vmatprep.subr.mxu0 0.0
        %336 = vmatpush1.msra.mxu0 %v308
        %337 = vmatprep.subr.mxu0 0.0
        %338 = vmatpush1.msra.mxu0 %v309
        %339 = vmatprep.subr.mxu0 0.0
        %340 = vmatpush1.msra.mxu0 %v310
        %341 = vmatprep.subr.mxu0 0.0
        %342 = vmatpush1.msra.mxu0 %v311
        %343 = vmatprep.subr.mxu0 0.0
        %344 = vmatpush1.msra.mxu0 %v312
        %345 = vmatprep.subr.mxu0 0.0
        %346 = vmatpush1.msra.mxu0 %v313
        %347 = vmatprep.subr.mxu0 0.0
        %348 = vmatpush1.msra.mxu0 %v314
        %349 = vmatprep.subr.mxu0 0.0
        %350 = vmatpush1.msra.mxu0 %v315
        %351 = vmatprep.subr.mxu0 0.0
        %352 = vmatpush1.msra.mxu0 %v316
        %353 = vmatprep.subr.mxu0 0.0
        %354 = vmatpush1.msra.mxu0 %v317
        %355 = vmatprep.subr.mxu0 0.0
        %356 = vmatpush1.msra.mxu0 0.0
        %357 = vmatprep.subr.mxu0 0.0
        %358 = vmatpush1.msra.mxu0 0.0
        %359 = vmatprep.subr.mxu0 0.0
        %360 = vmatpush1.msra.mxu0 0.0
        %361 = vmatprep.subr.mxu0 0.0
        %362 = vmatpush1.msra.mxu0 0.0
        %363 = vmatprep.subr.mxu0 0.0
        %364 = vmatpush1.msra.mxu0 0.0
        %365 = vmatprep.subr.mxu0 0.0
        %366 = vmatpush1.msra.mxu0 0.0
        %367 = vmatprep.subr.mxu0 0.0
        %368 = vmatpush1.msra.mxu0 0.0
        %369 = vmatprep.subr.mxu0 0.0
        %370 = vmatpush1.msra.mxu0 0.0
        %371 = vmatprep.subr.mxu0 0.0
        %372 = vmatpush1.msra.mxu0 0.0
        %373 = vmatprep.subr.mxu0 0.0
        %374 = vmatpush1.msra.mxu0 0.0
        %375 = vmatprep.subr.mxu0 0.0
        %376 = vmatpush1.msra.mxu0 0.0
        %377 = vmatprep.subr.mxu0 0.0
        %378 = vmatpush1.msra.mxu0 0.0
        %379 = vmatprep.subr.mxu0 0.0
        %380 = vmatpush1.msra.mxu0 0.0
        %381 = vmatprep.subr.mxu0 0.0
        %382 = vmatpush1.msra.mxu0 0.0
        %383 = vmatprep.subr.mxu0 0.0
        %384 = vmatpush1.msra.mxu0 0.0
        %385 = vmatprep.subr.mxu0 0.0
        %386 = vmatpush1.msra.mxu0 0.0
        %387 = vmatprep.mubr.f32.mxu0 0.0
        %388 = vmatmul.mubr.f32.gmra.mrb[0].mxu0 %v321
        %v389 = vpop.f32.mrb[0].mxu0
        %v390 = vadd.f32 0.0, %v389
        %v391 = vpop.f32.mrb[0].mxu0
        %392 = vdwg.mxu0
        %v393 = vadd.f32 %v301, %v390
        %394 = vst [vmem:[#allocation2] sm:$0x3] %v393
        %p395 = scmp.eq.s32.totalorder %s23, 1
        // Predicated region
        $region53: #{tpu_custom_call.1} parent=39 // pred_check
          %p396 = pneg %p395
        $region54: #{tpu_custom_call.1} parent=39 // pred_check_branch
          %398 = sbr.rel (%p396) target = $region56
        $region55: #{tpu_custom_call.1} parent=39 // pred_region
          %v399 = vld [vmem:[#allocation2] sm:$0x3]
          %v400 = vld [vmem:[%s2] sm:$0x1]
          %v402 = vlaneseq
          %v403 = vshrl.u32 %v402, 7
          %v404 = vsub.s32 0, %v403
          %v405 = vrot.slane %v400, %v404
          %v407 = vadd.f32 %v399, %v405
          %vm408 = vcmask 1041408
          %v409 = vsel %vm408, %v407, 0.0
          %v410 = vrot.slane %v409, 4
          %v411 = vadd.f32 %v409, %v410
          %v412 = vrot.slane %v411, 2
          %v413 = vadd.f32 %v411, %v412
          %v414 = vrot.slane %v413, 1
          %v415 = vadd.f32 %v413, %v414
          %v416 = vrcp.pop 2.0
          %v417 = vmul.f32 %v415, %v416
          %v418 = vsub.f32 %v407, %v417
          %v419 = vmul.f32 %v418, %v418
          %v420 = vsel %vm408, %v419, 0.0
          %v421 = vrot.slane %v420, 4
          %v422 = vadd.f32 %v420, %v421
          %v423 = vrot.slane %v422, 2
          %v424 = vadd.f32 %v422, %v423
          %v425 = vrot.slane %v424, 1
          %v426 = vadd.f32 %v424, %v425
          %v427 = vmul.f32 %v426, %v416
          %v428 = vadd.f32 %v427, 1e-05
          %v429 = vrsqrt.pop %v428
          %v430 = vmul.f32 %v418, %v429
          %v431 = vld [vmem:[%s3] sm:$0x1]
          %v433 = vlaneseq
          %v434 = vshrl.u32 %v433, 7
          %v435 = vsub.s32 0, %v434
          %v436 = vrot.slane %v431, %v435
          %v438 = vmul.f32 %v430, %v436
          %v439 = vld [vmem:[%s4] sm:$0x1]
          %v441 = vlaneseq
          %v442 = vshrl.u32 %v441, 7
          %v443 = vsub.s32 0, %v442
          %v444 = vrot.slane %v439, %v443
          %v446 = vadd.f32 %v438, %v444
          %447 = vst [vmem:[#allocation8] sm:$0x3] %v446
        $region56: #{tpu_custom_call.1} parent=39 // pred_fallthru
          _
        // Predicated region
        $region57: #{tpu_custom_call.1} parent=39 // pred_check
          %p448 = pneg %p151
        $region58: #{tpu_custom_call.1} parent=39 // pred_check_branch
          %450 = sbr.rel (%p448) target = $region60
        $region59: #{tpu_custom_call.1} parent=39 // pred_region
          %s452 = ssub.s32 32, 32
          %453 = vsyncadd [#allocation5], %s452
          %s455 = sshll.u32 [#allocation8], 4
          %s456 = int_to_ptr.vmem [resolvable:$true] %s455
          %458 = dma.vmem_to_hbm [thread:$0]  %s456, 32, %s5, [#allocation5]
        $region60: #{tpu_custom_call.1} parent=39 // pred_fallthru
          _
        // Predicated region
        $region61: #{tpu_custom_call.1} parent=39 // pred_check
          %p459 = pneg %p151
        $region62: #{tpu_custom_call.1} parent=39 // pred_check_branch
          %461 = sbr.rel (%p459) target = $region64
        $region63: #{tpu_custom_call.1} parent=39 // pred_region
          %462 = dma.done [#allocation5], 32
        $region64: #{tpu_custom_call.1} parent=39 // pred_fallthru
          _
      $region40: #{tpu_custom_call.1} parent=5 // pred_fallthru
        _
      %p463 = scmp.le.s32.totalorder 2, %s18
      // Predicated region
      $region65: #{tpu_custom_call.1} parent=5 // pred_check
        %p464 = pneg %p463
      $region66: #{tpu_custom_call.1} parent=5 // pred_check_branch
        %466 = sbr.rel (%p464) target = $region68
      $region67: #{tpu_custom_call.1} parent=5 // pred_region
        %s467 = ssub.s32 %s18, 2
      $region68: #{tpu_custom_call.1} parent=5 // pred_fallthru
        _
    $region6: #{tpu_custom_call.1} parent=1 // loop_footer
      %s22 = sadd.s32 1, %s18
    $region7: #{tpu_custom_call.1} parent=1 // loop_footer_branch
      %17 = sbr.rel target = $region3
    $region8: #{tpu_custom_call.1} parent=1 // loop_exit
      _
    %468 = vsyncpa [#allocation4], 1
    %s469 = scalar_lea.sflag [#allocation4], 1
    %470 = vsyncpa %s469, 1
    %471 = vsyncpa [#allocation7], 1
    %s472 = scalar_lea.sflag [#allocation7], 1
    %473 = vsyncpa %s472, 1
    %474 = vsyncpa [#allocation5], 1
    %s475 = scalar_lea.sflag [#allocation5], 1
    %476 = vsyncpa %s475, 1

</llo_original>
